<compile_context>
chip_gen: v7x
topology: tpu7x:2x2x1
jax: 0.10.0
libtpu: 0.0.40
codegen_flags: <defaults>
</compile_context>

<pallas_src>
import jax
import jax.numpy as jnp
from jax.experimental import pallas as pl
from jax.experimental.pallas import tpu as pltpu

_LANE = 128
_SUBLANE = 8


def _round_up(x, m):
    return ((x + m - 1) // m) * m


def _hw_budget():
    """Generation-aware (vmem_limit_bytes, target x-tile bytes).

    v7x has 64 MiB VMEM per TensorCore -> ~40 MiB scoped limit, 8 MiB tiles.
    v5e/v6e have 128 MiB -> 64 MiB scoped limit, 8 MiB tiles.  Double-buffered
    2 x 8 MiB input tiles plus tiny weight/output leave ample headroom on all.
    """
    try:
        vmem_cap = pltpu.get_tpu_info().vmem_capacity_bytes
    except Exception:
        vmem_cap = 128 * 1024 * 1024
    if vmem_cap <= 64 * 1024 * 1024:          # v7x-class
        return 40 * 1024 * 1024, 8 * 1024 * 1024
    return 64 * 1024 * 1024, 8 * 1024 * 1024  # v5e / v6e


def _choose_block_rows(total_rows, row_bytes, target_tile_bytes, requested_rows=None):
    """Rows per grid step (multiple of 8).  Single step for small inputs."""
    cap = _round_up(max(total_rows, 1), _SUBLANE)
    if requested_rows is not None:
        return min(max(_SUBLANE, _round_up(requested_rows, _SUBLANE)), cap)
    if total_rows * row_bytes <= target_tile_bytes:
        # Small-input fast path: grid steps are a serial loop (~0.35 us each);
        # don't split inputs that fit in one tile.
        return cap
    blk = max(_SUBLANE, (target_tile_bytes // row_bytes) // _SUBLANE * _SUBLANE)
    return min(blk, cap)


def _qmf_packed_kernel(x_ref, wsel_ref, b_ref, o_ref):
    # x_ref:    (block_m, pack*D)  lane-dense packed rows (pack orig rows / row)
    # wsel_ref: (pack*D, pack)     block-diagonal selector weight
    # b_ref:    (1, 1)             bias
    # o_ref:    (block_m, pack);   o[m, g] == y[(block_start + m) * pack + g]
    acc = jnp.dot(
        x_ref[...], wsel_ref[...],
        preferred_element_type=jnp.float32,
        precision=jax.lax.Precision.HIGHEST,   # exact-ish f32 MXU path
    )
    o_ref[...] = (acc + b_ref[0, 0]).astype(o_ref.dtype)


def _qmf_rowwise_kernel(x_ref, w_ref, b_ref, o_ref):
    # General path: x_ref (block_n, D), w_ref (1, D), o_ref (block_n, 1).
    y = jnp.sum(x_ref[...] * w_ref[...], axis=-1, keepdims=True) + b_ref[0, 0]
    o_ref[...] = y.astype(o_ref.dtype)


def qmf_forward(x, weight, bias, *, block_rows=None):
    """Pallas implementation of QMF.forward:  y = x @ weight.T + bias.

    x: (N, D) float32, weight: (1, D), bias: (1,)  ->  (N, 1) float32.
    """
    N, D = x.shape
    assert weight.shape == (1, D)
    x = x.astype(jnp.float32)
    w_row = weight.reshape(1, D).astype(jnp.float32)
    b2d = bias.reshape(1, 1).astype(jnp.float32)

    vmem_limit, target_tile = _hw_budget()
    compiler_params = pltpu.CompilerParams(
        dimension_semantics=("parallel",),     # batch axis -> megacore shardable
        vmem_limit_bytes=vmem_limit,
    )
    # TODO(synk): on v7x, confirm the batch axis really splits across both
    # TensorCores; if one TC idles, switch to pltpu.CORE_PARALLEL / pl.core_map.

    # Lane-pack small feature dims that divide 128 (keeps tiles fully lane-dense).
    pack = _LANE // D if (D < _LANE and _LANE % D == 0) else 1

    if pack > 1:
        # ---------------- lane-packed path ----------------
        n_pack = _round_up(N, pack)
        xp = x if n_pack == N else jnp.pad(x, ((0, n_pack - N), (0, 0)))  # < pack rows
        m_rows = n_pack // pack
        xp = xp.reshape(m_rows, pack * D)      # row-major -> free reshape

        # Block-diagonal selector: wsel[g*D + d, h] = w[d] if g == h else 0.
        wsel = (jnp.eye(pack, dtype=jnp.float32)[:, None, :]
                * w_row.reshape(1, D, 1)).reshape(pack * D, pack)

        req = None if block_rows is None else pl.cdiv(block_rows, pack)
        block_m = _choose_block_rows(m_rows, pack * D * 4, target_tile, req)
        nb = pl.cdiv(m_rows, block_m)          # last block may be partial (masked)

        cost = pl.CostEstimate(
            flops=2 * N * D, transcendentals=0,
            bytes_accessed=N * D * 4 + N * 4 + pack * D * pack * 4)

        out = pl.pallas_call(
            _qmf_packed_kernel,
            out_shape=jax.ShapeDtypeStruct((m_rows, pack), jnp.float32),
            grid_spec=pltpu.PrefetchScalarGridSpec(
                num_scalar_prefetch=0,
                grid=(nb,),
                in_specs=[
                    pl.BlockSpec((block_m, pack * D), lambda i: (i, 0)),  # x tile
                    pl.BlockSpec((pack * D, pack), lambda i: (0, 0)),     # selector (resident)
                    pl.BlockSpec((1, 1), lambda i: (0, 0)),               # bias (resident)
                ],
                out_specs=pl.BlockSpec((block_m, pack), lambda i: (i, 0)),
            ),
            compiler_params=compiler_params,
            cost_estimate=cost,
        )(xp, wsel, b2d)

        # out[m, g] == y[m*pack + g]  ->  plain row-major reshape, then drop pad.
        y = out.reshape(n_pack, 1)
        return y[:N] if n_pack != N else y

    # ---------------- general path (D not a divisor of 128, or D >= 128) ----------------
    row_bytes = _round_up(D, _LANE) * 4        # VMEM rows are lane-padded to 128
    block_n = _choose_block_rows(N, row_bytes, target_tile, block_rows)
    nb = pl.cdiv(N, block_n)                   # last block partial -> masked stores

    cost = pl.CostEstimate(flops=2 * N * D, transcendentals=0,
                           bytes_accessed=N * D * 4 + N * 4 + D * 4)

    out = pl.pallas_call(
        _qmf_rowwise_kernel,
        out_shape=jax.ShapeDtypeStruct((N, 1), jnp.float32),
        grid_spec=pltpu.PrefetchScalarGridSpec(
            num_scalar_prefetch=0,
            grid=(nb,),
            in_specs=[
                pl.BlockSpec((block_n, D), lambda i: (i, 0)),
                pl.BlockSpec((1, D), lambda i: (0, 0)),
                pl.BlockSpec((1, 1), lambda i: (0, 0)),
            ],
            out_specs=pl.BlockSpec((block_n, 1), lambda i: (i, 0)),
        ),
        compiler_params=compiler_params,
        cost_estimate=cost,
    )(x, w_row, b2d)
    return out


def _reference(x, weight, bias):
    # Elementwise f32 reference (avoids any matmul-precision differences).
    return jnp.sum(x * weight.reshape(1, -1), axis=-1, keepdims=True) + bias.reshape(1, 1)


if __name__ == "__main__":
    # Deterministic setup matching QMF.__init__: weight = 1/input_dim, bias = 0.
    input_dim = 32
    batch = 512

    key = jax.random.PRNGKey(0)
    x = jax.random.normal(key, (batch, input_dim), dtype=jnp.float32)
    weight = jnp.full((1, input_dim), 1.0 / input_dim, dtype=jnp.float32)
    bias = jnp.zeros((1,), dtype=jnp.float32)

    y_ref = _reference(x, weight, bias)

    # Packed path, small-input fast path (single grid step).
    y = jax.block_until_ready(qmf_forward(x, weight, bias))
    assert y.shape == (batch, 1)
    assert jnp.allclose(y, y_ref, atol=1e-4, rtol=1e-4)

    # Packed path with explicit smaller blocks -> several pipelined grid steps.
    y2 = jax.block_until_ready(qmf_forward(x, weight, bias, block_rows=128))
    assert jnp.allclose(y2, y_ref, atol=1e-4, rtol=1e-4)

    # General (non-packed) path: D not a divisor of 128, ragged batch (masked tail).
    d3, n3 = 40, 100
    x3 = jax.random.normal(jax.random.PRNGKey(0), (n3, d3), dtype=jnp.float32)
    w3 = jnp.full((1, d3), 1.0 / d3, dtype=jnp.float32)
    y3 = jax.block_until_ready(qmf_forward(x3, w3, bias))
    assert y3.shape == (n3, 1)
    assert jnp.allclose(y3, _reference(x3, w3, bias), atol=1e-4, rtol=1e-4)

    # Packed path with ragged batch (tiny < pack pad, masked partial block).
    n4 = 103
    x4 = jax.random.normal(jax.random.PRNGKey(1), (n4, input_dim), dtype=jnp.float32)
    y4 = jax.block_until_ready(qmf_forward(x4, weight, bias))
    assert y4.shape == (n4, 1)
    assert jnp.allclose(y4, _reference(x4, weight, bias), atol=1e-4, rtol=1e-4)

    # Packed path with D not a multiple of 8 (newly eligible after relaxation).
    d5, n5 = 4, 64
    x5 = jax.random.normal(jax.random.PRNGKey(2), (n5, d5), dtype=jnp.float32)
    w5 = jnp.full((1, d5), 1.0 / d5, dtype=jnp.float32)
    y5 = jax.block_until_ready(qmf_forward(x5, w5, bias))
    assert y5.shape == (n5, 1)
    assert jnp.allclose(y5, _reference(x5, w5, bias), atol=1e-4, rtol=1e-4)

    print("KERNEL_OK")
</pallas_src>

<mosaic_0001>
module attributes {stable_mosaic.version = 11 : i64} {
  func.func @_qmf_packed_kernel(%arg0: i32, %arg1: memref<128x128xf32, #tpu.memory_space<vmem>>, %arg2: memref<128x4xf32, #tpu.memory_space<vmem>>, %arg3: memref<1x1xf32, #tpu.memory_space<vmem>>, %arg4: memref<128x4xf32, #tpu.memory_space<vmem>>) attributes {dimension_semantics = [#tpu.dimension_semantics<parallel>], iteration_bounds = array<i64: 1>, scalar_prefetch = 0 : i64, scratch_operands = 0 : i64, tpu.core_type = #tpu.core_type<tc>, window_params = [{transform_indices = @transform_0, window_bounds = array<i64: 128, 128>}, {pipeline_mode = #tpu.pipeline_mode<synchronous>, transform_indices = @transform_1, window_bounds = array<i64: 128, 4>}, {pipeline_mode = #tpu.pipeline_mode<synchronous>, transform_indices = @transform_2, window_bounds = array<i64: 1, 1>}, {transform_indices = @transform_3, window_bounds = array<i64: 128, 4>}]} {
    %c0 = arith.constant 0 : index
    %c0_0 = arith.constant 0 : index
    %0 = vector.load %arg1[%c0, %c0_0] : memref<128x128xf32, #tpu.memory_space<vmem>>, vector<128x128xf32>
    %c0_1 = arith.constant 0 : index
    %c0_2 = arith.constant 0 : index
    %1 = vector.load %arg2[%c0_1, %c0_2] : memref<128x4xf32, #tpu.memory_space<vmem>>, vector<128x4xf32>
    %cst = arith.constant dense<0.000000e+00> : vector<128x4xf32>
    %2 = tpu.matmul %0, %1, %cst {dimension_numbers = #tpu.dot_dimension_numbers<[1], [0], [0], [1], [0, 0, 1, 1], [], []>, precision = #tpu.contract_precision<fp32>} : vector<128x128xf32>, vector<128x4xf32>, vector<128x4xf32> -> vector<128x4xf32>
    %c0_3 = arith.constant 0 : index
    %c0_4 = arith.constant 0 : index
    %3 = vector.load %arg3[%c0_3, %c0_4] : memref<1x1xf32, #tpu.memory_space<vmem>>, vector<1x1xf32>
    %4 = vector.extract %3[0, 0] : f32 from vector<1x1xf32>
    %5 = vector.broadcast %4 : f32 to vector<128x4xf32>
    %6 = arith.addf %2, %5 : vector<128x4xf32>
    %c0_5 = arith.constant 0 : index
    %c0_6 = arith.constant 0 : index
    %7 = vector.load %arg4[%c0_5, %c0_6] : memref<128x4xf32, #tpu.memory_space<vmem>>, vector<128x4xf32>
    tpu.vector_store %arg4[%c0_5, %c0_6], %6 {strides = array<i32>} : memref<128x4xf32, #tpu.memory_space<vmem>>, vector<128x4xf32>,
    return
  }
  func.func @transform_0(%arg0: i32) -> (i32, i32) {
    %c0_i32 = arith.constant 0 : i32
    %c0_i32_0 = arith.constant 0 : i32
    return %arg0, %c0_i32 : i32, i32
  }
  func.func @transform_1(%arg0: i32) -> (i32, i32) {
    %c0_i32 = arith.constant 0 : i32
    %c0_i32_0 = arith.constant 0 : i32
    %c0_i32_1 = arith.constant 0 : i32
    return %c0_i32, %c0_i32_0 : i32, i32
  }
  func.func @transform_2(%arg0: i32) -> (i32, i32) {
    %c0_i32 = arith.constant 0 : i32
    %c0_i32_0 = arith.constant 0 : i32
    %c0_i32_1 = arith.constant 0 : i32
    return %c0_i32, %c0_i32_0 : i32, i32
  }
  func.func @transform_3(%arg0: i32) -> (i32, i32) {
    %c0_i32 = arith.constant 0 : i32
    %c0_i32_0 = arith.constant 0 : i32
    return %arg0, %c0_i32 : i32, i32
  }
}

</mosaic_0001>

<llo_original>
// kernel: tpu_custom_call.1
$region0: #{tpu_custom_call.1}
  #allocation0 [shape = 'u32[]', space=smem, size = 0x4, offset = 0x4, fixed_abs, tag = 'smem constant byte address 0x4 - core index']
  #allocation1 [shape = 'u32[144,128]{1,0:T(1,128)}', space=vmem, size = 0x12000, scoped, tag = 'internal scratch']
  #allocation2 [shape = 'f32[1,1]{1,0:T(1,128)S(1)}', space=vmem, size = 0x200, scoped, tag = 'scoped memory for tpu_custom_call.1']
  %s0 = inlined_call_operand.hbm [shape: f32[128,128], index: 0, kind: input, shape index: {}]
  %s1 = inlined_call_operand.hbm [shape: f32[128,4], index: 1, kind: input, shape index: {}]
  %s2 = inlined_call_operand.<no memory space> [shape: f32[1,1], index: 2, kind: input, shape index: {}]
  %s3 = inlined_call_operand.hbm [shape: f32[128,4], index: 3, kind: output, shape index: {}]
  %s4 = sld [smem:[#allocation0]]
  $region30: #{tpu_custom_call.1} parent=0
    _
  %s6 = ssub.s32 1, %s4
  %s7 = scalar_select 0, %s6, %s4
  %v8 = vstv %s2
  %9 = vst [vmem:[#allocation2] sm:$0x1] %v8
  $region1: #{tpu_custom_call.1} parent=0
    #allocation3 [shape = 'u8[65536]{0}', space=vmem, size = 0x10000, scoped, tag = 'input window, operand 0, single buffered']
    #allocation4 [shape = 's32[1]{0}', space=sflag, size = 0x4, scoped, tag = 'scoped memory for tpu_custom_call.1']
    #allocation5 [shape = 's32[1]{0}', space=sflag, size = 0x4, scoped, tag = 'scoped memory for tpu_custom_call.1']
    #allocation6 [shape = 'u8[65536]{0}', space=vmem, size = 0x10000, scoped, tag = 'input window, operand 1, single buffered']
    #allocation7 [shape = 's32[1]{0}', space=sflag, size = 0x4, scoped, tag = 'scoped memory for tpu_custom_call.1']
    #allocation8 [shape = 'u8[65536]{0}', space=vmem, size = 0x10000, scoped, tag = 'output window, operand 0, single buffered']
    %10 = vsyncpa [#allocation4], 0
    %11 = vsyncpa [#allocation7], 0
    %12 = vsyncpa [#allocation5], 0
    // Predicated region
    $region2: #{tpu_custom_call.1} parent=1 // pred_check
      _
    $region3: #{tpu_custom_call.1} parent=1 // pred_check_branch
      %14 = sbr.rel (0) target = $region5
    $region4: #{tpu_custom_call.1} parent=1 // pred_region
      %s16 = ssub.s32 2048, 2048
      %17 = vsyncadd [#allocation4], %s16
      %s18 = sshll.u32 [#allocation3], 4
      %s19 = int_to_ptr.vmem [resolvable:$true] %s18
      %24 = dma.hbm_to_vmem [thread:$0]  %s0, 2048, %s19, [#allocation4], 128, 128, 8
    $region5: #{tpu_custom_call.1} parent=1 // pred_fallthru
      _
    // Predicated region
    $region6: #{tpu_custom_call.1} parent=1 // pred_check
      _
    $region7: #{tpu_custom_call.1} parent=1 // pred_check_branch
      %26 = sbr.rel (0) target = $region9
    $region8: #{tpu_custom_call.1} parent=1 // pred_region
      %s28 = ssub.s32 2048, 2048
      %29 = vsyncadd [#allocation7], %s28
      %s30 = sshll.u32 [#allocation6], 4
      %s31 = int_to_ptr.vmem [resolvable:$true] %s30
      %36 = dma.hbm_to_vmem [thread:$0]  %s1, 2048, %s31, [#allocation7], 128, 128, 8
    $region9: #{tpu_custom_call.1} parent=1 // pred_fallthru
      _
    // Predicated region
    $region10: #{tpu_custom_call.1} parent=1 // pred_check
      _
    $region11: #{tpu_custom_call.1} parent=1 // pred_check_branch
      %38 = sbr.rel (0) target = $region13
    $region12: #{tpu_custom_call.1} parent=1 // pred_region
      _
    $region13: #{tpu_custom_call.1} parent=1 // pred_fallthru
      _
    // Predicated region
    $region14: #{tpu_custom_call.1} parent=1 // pred_check
      _
    $region15: #{tpu_custom_call.1} parent=1 // pred_check_branch
      %40 = sbr.rel (0) target = $region17
    $region16: #{tpu_custom_call.1} parent=1 // pred_region
      %41 = dma.done [#allocation4], 2048
    $region17: #{tpu_custom_call.1} parent=1 // pred_fallthru
      _
    // Predicated region
    $region18: #{tpu_custom_call.1} parent=1 // pred_check
      _
    $region19: #{tpu_custom_call.1} parent=1 // pred_check_branch
      %43 = sbr.rel (0) target = $region21
    $region20: #{tpu_custom_call.1} parent=1 // pred_region
      %44 = dma.done [#allocation7], 2048
    $region21: #{tpu_custom_call.1} parent=1 // pred_fallthru
      _
    %v45 = vld [vmem:[#allocation3] sm:$0xff]
    %v46 = vld [vmem:[#allocation3 + $0x8] sm:$0xff]
    %v47 = vld [vmem:[#allocation3 + $0x10] sm:$0xff]
    %v48 = vld [vmem:[#allocation3 + $0x18] sm:$0xff]
    %v49 = vld [vmem:[#allocation3 + $0x20] sm:$0xff]
    %v50 = vld [vmem:[#allocation3 + $0x28] sm:$0xff]
    %v51 = vld [vmem:[#allocation3 + $0x30] sm:$0xff]
    %v52 = vld [vmem:[#allocation3 + $0x38] sm:$0xff]
    %v53 = vld [vmem:[#allocation3 + $0x40] sm:$0xff]
    %v54 = vld [vmem:[#allocation3 + $0x48] sm:$0xff]
    %v55 = vld [vmem:[#allocation3 + $0x50] sm:$0xff]
    %v56 = vld [vmem:[#allocation3 + $0x58] sm:$0xff]
    %v57 = vld [vmem:[#allocation3 + $0x60] sm:$0xff]
    %v58 = vld [vmem:[#allocation3 + $0x68] sm:$0xff]
    %v59 = vld [vmem:[#allocation3 + $0x70] sm:$0xff]
    %v60 = vld [vmem:[#allocation3 + $0x78] sm:$0xff]
    %v61 = vld [vmem:[#allocation6] sm:$0xff]
    %v62 = vld [vmem:[#allocation6 + $0x8] sm:$0xff]
    %v63 = vld [vmem:[#allocation6 + $0x10] sm:$0xff]
    %v64 = vld [vmem:[#allocation6 + $0x18] sm:$0xff]
    %v65 = vld [vmem:[#allocation6 + $0x20] sm:$0xff]
    %v66 = vld [vmem:[#allocation6 + $0x28] sm:$0xff]
    %v67 = vld [vmem:[#allocation6 + $0x30] sm:$0xff]
    %v68 = vld [vmem:[#allocation6 + $0x38] sm:$0xff]
    %v69 = vld [vmem:[#allocation6 + $0x40] sm:$0xff]
    %v70 = vld [vmem:[#allocation6 + $0x48] sm:$0xff]
    %v71 = vld [vmem:[#allocation6 + $0x50] sm:$0xff]
    %v72 = vld [vmem:[#allocation6 + $0x58] sm:$0xff]
    %v73 = vld [vmem:[#allocation6 + $0x60] sm:$0xff]
    %v74 = vld [vmem:[#allocation6 + $0x68] sm:$0xff]
    %v75 = vld [vmem:[#allocation6 + $0x70] sm:$0xff]
    %v76 = vld [vmem:[#allocation6 + $0x78] sm:$0xff]
    %v77 = vld [vmem:[#allocation2] sm:$0x1]
    %s78 = vtos %v77
    %v79 = vstv %s78
    %80 = vmatprep.subr.mxu0 0.0
    %v81 = vand.u32 %v61, 4294901760
    %82 = vmatpush1.msra.mxu0 %v81
    %83 = vmatprep.subr.mxu0 0.0
    %v84 = vand.u32 %v62, 4294901760
    %85 = vmatpush1.msra.mxu0 %v84
    %86 = vmatprep.subr.mxu0 0.0
    %v87 = vand.u32 %v63, 4294901760
    %88 = vmatpush1.msra.mxu0 %v87
    %89 = vmatprep.subr.mxu0 0.0
    %v90 = vand.u32 %v64, 4294901760
    %91 = vmatpush1.msra.mxu0 %v90
    %92 = vmatprep.subr.mxu0 0.0
    %v93 = vand.u32 %v65, 4294901760
    %94 = vmatpush1.msra.mxu0 %v93
    %95 = vmatprep.subr.mxu0 0.0
    %v96 = vand.u32 %v66, 4294901760
    %97 = vmatpush1.msra.mxu0 %v96
    %98 = vmatprep.subr.mxu0 0.0
    %v99 = vand.u32 %v67, 4294901760
    %100 = vmatpush1.msra.mxu0 %v99
    %101 = vmatprep.subr.mxu0 0.0
    %v102 = vand.u32 %v68, 4294901760
    %103 = vmatpush1.msra.mxu0 %v102
    %104 = vmatprep.subr.mxu0 0.0
    %v105 = vand.u32 %v69, 4294901760
    %106 = vmatpush1.msra.mxu0 %v105
    %107 = vmatprep.subr.mxu0 0.0
    %v108 = vand.u32 %v70, 4294901760
    %109 = vmatpush1.msra.mxu0 %v108
    %110 = vmatprep.subr.mxu0 0.0
    %v111 = vand.u32 %v71, 4294901760
    %112 = vmatpush1.msra.mxu0 %v111
    %113 = vmatprep.subr.mxu0 0.0
    %v114 = vand.u32 %v72, 4294901760
    %115 = vmatpush1.msra.mxu0 %v114
    %116 = vmatprep.subr.mxu0 0.0
    %v117 = vand.u32 %v73, 4294901760
    %118 = vmatpush1.msra.mxu0 %v117
    %119 = vmatprep.subr.mxu0 0.0
    %v120 = vand.u32 %v74, 4294901760
    %121 = vmatpush1.msra.mxu0 %v120
    %122 = vmatprep.subr.mxu0 0.0
    %v123 = vand.u32 %v75, 4294901760
    %124 = vmatpush1.msra.mxu0 %v123
    %125 = vmatprep.subr.mxu0 0.0
    %v126 = vand.u32 %v76, 4294901760
    %127 = vmatpush1.msra.mxu0 %v126
    %128 = vmatprep.subr.mxu0 0.0
    %129 = vmatpush1.msra.mxu0 0.0
    %130 = vmatprep.subr.mxu0 0.0
    %131 = vmatpush1.msra.mxu0 0.0
    %132 = vmatprep.subr.mxu0 0.0
    %133 = vmatpush1.msra.mxu0 0.0
    %134 = vmatprep.subr.mxu0 0.0
    %135 = vmatpush1.msra.mxu0 0.0
    %136 = vmatprep.subr.mxu0 0.0
    %137 = vmatpush1.msra.mxu0 0.0
    %138 = vmatprep.subr.mxu0 0.0
    %139 = vmatpush1.msra.mxu0 0.0
    %140 = vmatprep.subr.mxu0 0.0
    %141 = vmatpush1.msra.mxu0 0.0
    %142 = vmatprep.subr.mxu0 0.0
    %143 = vmatpush1.msra.mxu0 0.0
    %144 = vmatprep.subr.mxu0 0.0
    %145 = vmatpush1.msra.mxu0 0.0
    %146 = vmatprep.subr.mxu0 0.0
    %147 = vmatpush1.msra.mxu0 0.0
    %148 = vmatprep.subr.mxu0 0.0
    %149 = vmatpush1.msra.mxu0 0.0
    %150 = vmatprep.subr.mxu0 0.0
    %151 = vmatpush1.msra.mxu0 0.0
    %152 = vmatprep.subr.mxu0 0.0
    %153 = vmatpush1.msra.mxu0 0.0
    %154 = vmatprep.subr.mxu0 0.0
    %155 = vmatpush1.msra.mxu0 0.0
    %156 = vmatprep.subr.mxu0 0.0
    %157 = vmatpush1.msra.mxu0 0.0
    %158 = vmatprep.subr.mxu0 0.0
    %159 = vmatpush1.msra.mxu0 0.0
    %160 = vmatprep.mubr.f32.mxu0 0.0
    %v161 = vand.u32 %v45, 4294901760
    %v162 = vsub.f32 %v45, %v161
    %v163 = vand.u32 %v162, 4294901760
    %v164 = vsub.f32 %v162, %v163
    %v165 = vand.u32 %v164, 4294901760
    %166 = vmatmul.mubr.f32.gmra.mrb[0].mxu0 %v165
    %v167 = vpop.f32.mrb[0].mxu0
    %v168 = vadd.f32 %v79, %v167
    %v169 = vpop.f32.mrb[0].mxu0
    %170 = vmatprep.mubr.f32.mxu0 0.0
    %v171 = vand.u32 %v46, 4294901760
    %v172 = vsub.f32 %v46, %v171
    %v173 = vand.u32 %v172, 4294901760
    %v174 = vsub.f32 %v172, %v173
    %v175 = vand.u32 %v174, 4294901760
    %176 = vmatmul.mubr.f32.gmra.mrb[0].mxu0 %v175
    %v177 = vpop.f32.mrb[0].mxu0
    %v178 = vadd.f32 %v79, %v177
    %v179 = vpop.f32.mrb[0].mxu0
    %180 = vmatprep.mubr.f32.mxu0 0.0
    %v181 = vand.u32 %v47, 4294901760
    %v182 = vsub.f32 %v47, %v181
    %v183 = vand.u32 %v182, 4294901760
    %v184 = vsub.f32 %v182, %v183
    %v185 = vand.u32 %v184, 4294901760
    %186 = vmatmul.mubr.f32.gmra.mrb[0].mxu0 %v185
    %v187 = vpop.f32.mrb[0].mxu0
    %v188 = vadd.f32 %v79, %v187
    %v189 = vpop.f32.mrb[0].mxu0
    %190 = vmatprep.mubr.f32.mxu0 0.0
    %v191 = vand.u32 %v48, 4294901760
    %v192 = vsub.f32 %v48, %v191
    %v193 = vand.u32 %v192, 4294901760
    %v194 = vsub.f32 %v192, %v193
    %v195 = vand.u32 %v194, 4294901760
    %196 = vmatmul.mubr.f32.gmra.mrb[0].mxu0 %v195
    %v197 = vpop.f32.mrb[0].mxu0
    %v198 = vadd.f32 %v79, %v197
    %v199 = vpop.f32.mrb[0].mxu0
    %200 = vmatprep.mubr.f32.mxu0 0.0
    %v201 = vand.u32 %v49, 4294901760
    %v202 = vsub.f32 %v49, %v201
    %v203 = vand.u32 %v202, 4294901760
    %v204 = vsub.f32 %v202, %v203
    %v205 = vand.u32 %v204, 4294901760
    %206 = vmatmul.mubr.f32.gmra.mrb[0].mxu0 %v205
    %v207 = vpop.f32.mrb[0].mxu0
    %v208 = vadd.f32 %v79, %v207
    %v209 = vpop.f32.mrb[0].mxu0
    %210 = vmatprep.mubr.f32.mxu0 0.0
    %v211 = vand.u32 %v50, 4294901760
    %v212 = vsub.f32 %v50, %v211
    %v213 = vand.u32 %v212, 4294901760
    %v214 = vsub.f32 %v212, %v213
    %v215 = vand.u32 %v214, 4294901760
    %216 = vmatmul.mubr.f32.gmra.mrb[0].mxu0 %v215
    %v217 = vpop.f32.mrb[0].mxu0
    %v218 = vadd.f32 %v79, %v217
    %v219 = vpop.f32.mrb[0].mxu0
    %220 = vmatprep.mubr.f32.mxu0 0.0
    %v221 = vand.u32 %v51, 4294901760
    %v222 = vsub.f32 %v51, %v221
    %v223 = vand.u32 %v222, 4294901760
    %v224 = vsub.f32 %v222, %v223
    %v225 = vand.u32 %v224, 4294901760
    %226 = vmatmul.mubr.f32.gmra.mrb[0].mxu0 %v225
    %v227 = vpop.f32.mrb[0].mxu0
    %v228 = vadd.f32 %v79, %v227
    %v229 = vpop.f32.mrb[0].mxu0
    %230 = vmatprep.mubr.f32.mxu0 0.0
    %v231 = vand.u32 %v52, 4294901760
    %v232 = vsub.f32 %v52, %v231
    %v233 = vand.u32 %v232, 4294901760
    %v234 = vsub.f32 %v232, %v233
    %v235 = vand.u32 %v234, 4294901760
    %236 = vmatmul.mubr.f32.gmra.mrb[0].mxu0 %v235
    %v237 = vpop.f32.mrb[0].mxu0
    %v238 = vadd.f32 %v79, %v237
    %v239 = vpop.f32.mrb[0].mxu0
    %240 = vmatprep.mubr.f32.mxu0 0.0
    %v241 = vand.u32 %v53, 4294901760
    %v242 = vsub.f32 %v53, %v241
    %v243 = vand.u32 %v242, 4294901760
    %v244 = vsub.f32 %v242, %v243
    %v245 = vand.u32 %v244, 4294901760
    %246 = vmatmul.mubr.f32.gmra.mrb[0].mxu0 %v245
    %v247 = vpop.f32.mrb[0].mxu0
    %v248 = vadd.f32 %v79, %v247
    %v249 = vpop.f32.mrb[0].mxu0
    %250 = vmatprep.mubr.f32.mxu0 0.0
    %v251 = vand.u32 %v54, 4294901760
    %v252 = vsub.f32 %v54, %v251
    %v253 = vand.u32 %v252, 4294901760
    %v254 = vsub.f32 %v252, %v253
    %v255 = vand.u32 %v254, 4294901760
    %256 = vmatmul.mubr.f32.gmra.mrb[0].mxu0 %v255
    %v257 = vpop.f32.mrb[0].mxu0
    %v258 = vadd.f32 %v79, %v257
    %v259 = vpop.f32.mrb[0].mxu0
    %260 = vmatprep.mubr.f32.mxu0 0.0
    %v261 = vand.u32 %v55, 4294901760
    %v262 = vsub.f32 %v55, %v261
    %v263 = vand.u32 %v262, 4294901760
    %v264 = vsub.f32 %v262, %v263
    %v265 = vand.u32 %v264, 4294901760
    %266 = vmatmul.mubr.f32.gmra.mrb[0].mxu0 %v265
    %v267 = vpop.f32.mrb[0].mxu0
    %v268 = vadd.f32 %v79, %v267
    %v269 = vpop.f32.mrb[0].mxu0
    %270 = vmatprep.mubr.f32.mxu0 0.0
    %v271 = vand.u32 %v56, 4294901760
    %v272 = vsub.f32 %v56, %v271
    %v273 = vand.u32 %v272, 4294901760
    %v274 = vsub.f32 %v272, %v273
    %v275 = vand.u32 %v274, 4294901760
    %276 = vmatmul.mubr.f32.gmra.mrb[0].mxu0 %v275
    %v277 = vpop.f32.mrb[0].mxu0
    %v278 = vadd.f32 %v79, %v277
    %v279 = vpop.f32.mrb[0].mxu0
    %280 = vmatprep.mubr.f32.mxu0 0.0
    %v281 = vand.u32 %v57, 4294901760
    %v282 = vsub.f32 %v57, %v281
    %v283 = vand.u32 %v282, 4294901760
    %v284 = vsub.f32 %v282, %v283
    %v285 = vand.u32 %v284, 4294901760
    %286 = vmatmul.mubr.f32.gmra.mrb[0].mxu0 %v285
    %v287 = vpop.f32.mrb[0].mxu0
    %v288 = vadd.f32 %v79, %v287
    %v289 = vpop.f32.mrb[0].mxu0
    %290 = vmatprep.mubr.f32.mxu0 0.0
    %v291 = vand.u32 %v58, 4294901760
    %v292 = vsub.f32 %v58, %v291
    %v293 = vand.u32 %v292, 4294901760
    %v294 = vsub.f32 %v292, %v293
    %v295 = vand.u32 %v294, 4294901760
    %296 = vmatmul.mubr.f32.gmra.mrb[0].mxu0 %v295
    %v297 = vpop.f32.mrb[0].mxu0
    %v298 = vadd.f32 %v79, %v297
    %v299 = vpop.f32.mrb[0].mxu0
    %300 = vmatprep.mubr.f32.mxu0 0.0
    %v301 = vand.u32 %v59, 4294901760
    %v302 = vsub.f32 %v59, %v301
    %v303 = vand.u32 %v302, 4294901760
    %v304 = vsub.f32 %v302, %v303
    %v305 = vand.u32 %v304, 4294901760
    %306 = vmatmul.mubr.f32.gmra.mrb[0].mxu0 %v305
    %v307 = vpop.f32.mrb[0].mxu0
    %v308 = vadd.f32 %v79, %v307
    %v309 = vpop.f32.mrb[0].mxu0
    %310 = vmatprep.mubr.f32.mxu0 0.0
    %v311 = vand.u32 %v60, 4294901760
    %v312 = vsub.f32 %v60, %v311
    %v313 = vand.u32 %v312, 4294901760
    %v314 = vsub.f32 %v312, %v313
    %v315 = vand.u32 %v314, 4294901760
    %316 = vmatmul.mubr.f32.gmra.mrb[0].mxu0 %v315
    %v317 = vpop.f32.mrb[0].mxu0
    %v318 = vadd.f32 %v79, %v317
    %v319 = vpop.f32.mrb[0].mxu0
    %320 = vdwg.mxu0
    %321 = vmatprep.subr.mxu0 0.0
    %v322 = vand.u32 %v61, 4294901760
    %v323 = vsub.f32 %v61, %v322
    %v324 = vand.u32 %v323, 4294901760
    %v325 = vsub.f32 %v323, %v324
    %v326 = vand.u32 %v325, 4294901760
    %327 = vmatpush1.msra.mxu0 %v326
    %328 = vmatprep.subr.mxu0 0.0
    %v329 = vand.u32 %v62, 4294901760
    %v330 = vsub.f32 %v62, %v329
    %v331 = vand.u32 %v330, 4294901760
    %v332 = vsub.f32 %v330, %v331
    %v333 = vand.u32 %v332, 4294901760
    %334 = vmatpush1.msra.mxu0 %v333
    %335 = vmatprep.subr.mxu0 0.0
    %v336 = vand.u32 %v63, 4294901760
    %v337 = vsub.f32 %v63, %v336
    %v338 = vand.u32 %v337, 4294901760
    %v339 = vsub.f32 %v337, %v338
    %v340 = vand.u32 %v339, 4294901760
    %341 = vmatpush1.msra.mxu0 %v340
    %342 = vmatprep.subr.mxu0 0.0
    %v343 = vand.u32 %v64, 4294901760
    %v344 = vsub.f32 %v64, %v343
    %v345 = vand.u32 %v344, 4294901760
    %v346 = vsub.f32 %v344, %v345
    %v347 = vand.u32 %v346, 4294901760
    %348 = vmatpush1.msra.mxu0 %v347
    %349 = vmatprep.subr.mxu0 0.0
    %v350 = vand.u32 %v65, 4294901760
    %v351 = vsub.f32 %v65, %v350
    %v352 = vand.u32 %v351, 4294901760
    %v353 = vsub.f32 %v351, %v352
    %v354 = vand.u32 %v353, 4294901760
    %355 = vmatpush1.msra.mxu0 %v354
    %356 = vmatprep.subr.mxu0 0.0
    %v357 = vand.u32 %v66, 4294901760
    %v358 = vsub.f32 %v66, %v357
    %v359 = vand.u32 %v358, 4294901760
    %v360 = vsub.f32 %v358, %v359
    %v361 = vand.u32 %v360, 4294901760
    %362 = vmatpush1.msra.mxu0 %v361
    %363 = vmatprep.subr.mxu0 0.0
    %v364 = vand.u32 %v67, 4294901760
    %v365 = vsub.f32 %v67, %v364
    %v366 = vand.u32 %v365, 4294901760
    %v367 = vsub.f32 %v365, %v366
    %v368 = vand.u32 %v367, 4294901760
    %369 = vmatpush1.msra.mxu0 %v368
    %370 = vmatprep.subr.mxu0 0.0
    %v371 = vand.u32 %v68, 4294901760
    %v372 = vsub.f32 %v68, %v371
    %v373 = vand.u32 %v372, 4294901760
    %v374 = vsub.f32 %v372, %v373
    %v375 = vand.u32 %v374, 4294901760
    %376 = vmatpush1.msra.mxu0 %v375
    %377 = vmatprep.subr.mxu0 0.0
    %v378 = vand.u32 %v69, 4294901760
    %v379 = vsub.f32 %v69, %v378
    %v380 = vand.u32 %v379, 4294901760
    %v381 = vsub.f32 %v379, %v380
    %v382 = vand.u32 %v381, 4294901760
    %383 = vmatpush1.msra.mxu0 %v382
    %384 = vmatprep.subr.mxu0 0.0
    %v385 = vand.u32 %v70, 4294901760
    %v386 = vsub.f32 %v70, %v385
    %v387 = vand.u32 %v386, 4294901760
    %v388 = vsub.f32 %v386, %v387
    %v389 = vand.u32 %v388, 4294901760
    %390 = vmatpush1.msra.mxu0 %v389
    %391 = vmatprep.subr.mxu0 0.0
    %v392 = vand.u32 %v71, 4294901760
    %v393 = vsub.f32 %v71, %v392
    %v394 = vand.u32 %v393, 4294901760
    %v395 = vsub.f32 %v393, %v394
    %v396 = vand.u32 %v395, 4294901760
    %397 = vmatpush1.msra.mxu0 %v396
    %398 = vmatprep.subr.mxu0 0.0
    %v399 = vand.u32 %v72, 4294901760
    %v400 = vsub.f32 %v72, %v399
    %v401 = vand.u32 %v400, 4294901760
    %v402 = vsub.f32 %v400, %v401
    %v403 = vand.u32 %v402, 4294901760
    %404 = vmatpush1.msra.mxu0 %v403
    %405 = vmatprep.subr.mxu0 0.0
    %v406 = vand.u32 %v73, 4294901760
    %v407 = vsub.f32 %v73, %v406
    %v408 = vand.u32 %v407, 4294901760
    %v409 = vsub.f32 %v407, %v408
    %v410 = vand.u32 %v409, 4294901760
    %411 = vmatpush1.msra.mxu0 %v410
    %412 = vmatprep.subr.mxu0 0.0
    %v413 = vand.u32 %v74, 4294901760
    %v414 = vsub.f32 %v74, %v413
    %v415 = vand.u32 %v414, 4294901760
    %v416 = vsub.f32 %v414, %v415
    %v417 = vand.u32 %v416, 4294901760
    %418 = vmatpush1.msra.mxu0 %v417
    %419 = vmatprep.subr.mxu0 0.0
    %v420 = vand.u32 %v75, 4294901760
    %v421 = vsub.f32 %v75, %v420
    %v422 = vand.u32 %v421, 4294901760
    %v423 = vsub.f32 %v421, %v422
    %v424 = vand.u32 %v423, 4294901760
    %425 = vmatpush1.msra.mxu0 %v424
    %426 = vmatprep.subr.mxu0 0.0
    %v427 = vand.u32 %v76, 4294901760
    %v428 = vsub.f32 %v76, %v427
    %v429 = vand.u32 %v428, 4294901760
    %v430 = vsub.f32 %v428, %v429
    %v431 = vand.u32 %v430, 4294901760
    %432 = vmatpush1.msra.mxu0 %v431
    %433 = vmatprep.subr.mxu0 0.0
    %434 = vmatpush1.msra.mxu0 0.0
    %435 = vmatprep.subr.mxu0 0.0
    %436 = vmatpush1.msra.mxu0 0.0
    %437 = vmatprep.subr.mxu0 0.0
    %438 = vmatpush1.msra.mxu0 0.0
    %439 = vmatprep.subr.mxu0 0.0
    %440 = vmatpush1.msra.mxu0 0.0
    %441 = vmatprep.subr.mxu0 0.0
    %442 = vmatpush1.msra.mxu0 0.0
    %443 = vmatprep.subr.mxu0 0.0
    %444 = vmatpush1.msra.mxu0 0.0
    %445 = vmatprep.subr.mxu0 0.0
    %446 = vmatpush1.msra.mxu0 0.0
    %447 = vmatprep.subr.mxu0 0.0
    %448 = vmatpush1.msra.mxu0 0.0
    %449 = vmatprep.subr.mxu0 0.0
    %450 = vmatpush1.msra.mxu0 0.0
    %451 = vmatprep.subr.mxu0 0.0
    %452 = vmatpush1.msra.mxu0 0.0
    %453 = vmatprep.subr.mxu0 0.0
    %454 = vmatpush1.msra.mxu0 0.0
    %455 = vmatprep.subr.mxu0 0.0
    %456 = vmatpush1.msra.mxu0 0.0
    %457 = vmatprep.subr.mxu0 0.0
    %458 = vmatpush1.msra.mxu0 0.0
    %459 = vmatprep.subr.mxu0 0.0
    %460 = vmatpush1.msra.mxu0 0.0
    %461 = vmatprep.subr.mxu0 0.0
    %462 = vmatpush1.msra.mxu0 0.0
    %463 = vmatprep.subr.mxu0 0.0
    %464 = vmatpush1.msra.mxu0 0.0
    %465 = vmatprep.mubr.f32.mxu0 0.0
    %v466 = vand.u32 %v45, 4294901760
    %467 = vmatmul.mubr.f32.gmra.mrb[0].mxu0 %v466
    %v468 = vpop.f32.mrb[0].mxu0
    %v469 = vadd.f32 %v168, %v468
    %v470 = vpop.f32.mrb[0].mxu0
    %471 = vmatprep.mubr.f32.mxu0 0.0
    %v472 = vand.u32 %v46, 4294901760
    %473 = vmatmul.mubr.f32.gmra.mrb[0].mxu0 %v472
    %v474 = vpop.f32.mrb[0].mxu0
    %v475 = vadd.f32 %v178, %v474
    %v476 = vpop.f32.mrb[0].mxu0
    %477 = vmatprep.mubr.f32.mxu0 0.0
    %v478 = vand.u32 %v47, 4294901760
    %479 = vmatmul.mubr.f32.gmra.mrb[0].mxu0 %v478
    %v480 = vpop.f32.mrb[0].mxu0
    %v481 = vadd.f32 %v188, %v480
    %v482 = vpop.f32.mrb[0].mxu0
    %483 = vmatprep.mubr.f32.mxu0 0.0
    %v484 = vand.u32 %v48, 4294901760
    %485 = vmatmul.mubr.f32.gmra.mrb[0].mxu0 %v484
    %v486 = vpop.f32.mrb[0].mxu0
    %v487 = vadd.f32 %v198, %v486
    %v488 = vpop.f32.mrb[0].mxu0
    %489 = vmatprep.mubr.f32.mxu0 0.0
    %v490 = vand.u32 %v49, 4294901760
    %491 = vmatmul.mubr.f32.gmra.mrb[0].mxu0 %v490
    %v492 = vpop.f32.mrb[0].mxu0
    %v493 = vadd.f32 %v208, %v492
    %v494 = vpop.f32.mrb[0].mxu0
    %495 = vmatprep.mubr.f32.mxu0 0.0
    %v496 = vand.u32 %v50, 4294901760
    %497 = vmatmul.mubr.f32.gmra.mrb[0].mxu0 %v496
    %v498 = vpop.f32.mrb[0].mxu0
    %v499 = vadd.f32 %v218, %v498
    %v500 = vpop.f32.mrb[0].mxu0
    %501 = vmatprep.mubr.f32.mxu0 0.0
    %v502 = vand.u32 %v51, 4294901760
    %503 = vmatmul.mubr.f32.gmra.mrb[0].mxu0 %v502
    %v504 = vpop.f32.mrb[0].mxu0
    %v505 = vadd.f32 %v228, %v504
    %v506 = vpop.f32.mrb[0].mxu0
    %507 = vmatprep.mubr.f32.mxu0 0.0
    %v508 = vand.u32 %v52, 4294901760
    %509 = vmatmul.mubr.f32.gmra.mrb[0].mxu0 %v508
    %v510 = vpop.f32.mrb[0].mxu0
    %v511 = vadd.f32 %v238, %v510
    %v512 = vpop.f32.mrb[0].mxu0
    %513 = vmatprep.mubr.f32.mxu0 0.0
    %v514 = vand.u32 %v53, 4294901760
    %515 = vmatmul.mubr.f32.gmra.mrb[0].mxu0 %v514
    %v516 = vpop.f32.mrb[0].mxu0
    %v517 = vadd.f32 %v248, %v516
    %v518 = vpop.f32.mrb[0].mxu0
    %519 = vmatprep.mubr.f32.mxu0 0.0
    %v520 = vand.u32 %v54, 4294901760
    %521 = vmatmul.mubr.f32.gmra.mrb[0].mxu0 %v520
    %v522 = vpop.f32.mrb[0].mxu0
    %v523 = vadd.f32 %v258, %v522
    %v524 = vpop.f32.mrb[0].mxu0
    %525 = vmatprep.mubr.f32.mxu0 0.0
    %v526 = vand.u32 %v55, 4294901760
    %527 = vmatmul.mubr.f32.gmra.mrb[0].mxu0 %v526
    %v528 = vpop.f32.mrb[0].mxu0
    %v529 = vadd.f32 %v268, %v528
    %v530 = vpop.f32.mrb[0].mxu0
    %531 = vmatprep.mubr.f32.mxu0 0.0
    %v532 = vand.u32 %v56, 4294901760
    %533 = vmatmul.mubr.f32.gmra.mrb[0].mxu0 %v532
    %v534 = vpop.f32.mrb[0].mxu0
    %v535 = vadd.f32 %v278, %v534
    %v536 = vpop.f32.mrb[0].mxu0
    %537 = vmatprep.mubr.f32.mxu0 0.0
    %v538 = vand.u32 %v57, 4294901760
    %539 = vmatmul.mubr.f32.gmra.mrb[0].mxu0 %v538
    %v540 = vpop.f32.mrb[0].mxu0
    %v541 = vadd.f32 %v288, %v540
    %v542 = vpop.f32.mrb[0].mxu0
    %543 = vmatprep.mubr.f32.mxu0 0.0
    %v544 = vand.u32 %v58, 4294901760
    %545 = vmatmul.mubr.f32.gmra.mrb[0].mxu0 %v544
    %v546 = vpop.f32.mrb[0].mxu0
    %v547 = vadd.f32 %v298, %v546
    %v548 = vpop.f32.mrb[0].mxu0
    %549 = vmatprep.mubr.f32.mxu0 0.0
    %v550 = vand.u32 %v59, 4294901760
    %551 = vmatmul.mubr.f32.gmra.mrb[0].mxu0 %v550
    %v552 = vpop.f32.mrb[0].mxu0
    %v553 = vadd.f32 %v308, %v552
    %v554 = vpop.f32.mrb[0].mxu0
    %555 = vmatprep.mubr.f32.mxu0 0.0
    %v556 = vand.u32 %v60, 4294901760
    %557 = vmatmul.mubr.f32.gmra.mrb[0].mxu0 %v556
    %v558 = vpop.f32.mrb[0].mxu0
    %v559 = vadd.f32 %v318, %v558
    %v560 = vpop.f32.mrb[0].mxu0
    %561 = vdwg.mxu0
    %562 = vmatprep.subr.mxu0 0.0
    %v563 = vand.u32 %v61, 4294901760
    %v564 = vsub.f32 %v61, %v563
    %565 = vmatpush1.msra.mxu0 %v564
    %566 = vmatprep.subr.mxu0 0.0
    %v567 = vand.u32 %v62, 4294901760
    %v568 = vsub.f32 %v62, %v567
    %569 = vmatpush1.msra.mxu0 %v568
    %570 = vmatprep.subr.mxu0 0.0
    %v571 = vand.u32 %v63, 4294901760
    %v572 = vsub.f32 %v63, %v571
    %573 = vmatpush1.msra.mxu0 %v572
    %574 = vmatprep.subr.mxu0 0.0
    %v575 = vand.u32 %v64, 4294901760
    %v576 = vsub.f32 %v64, %v575
    %577 = vmatpush1.msra.mxu0 %v576
    %578 = vmatprep.subr.mxu0 0.0
    %v579 = vand.u32 %v65, 4294901760
    %v580 = vsub.f32 %v65, %v579
    %581 = vmatpush1.msra.mxu0 %v580
    %582 = vmatprep.subr.mxu0 0.0
    %v583 = vand.u32 %v66, 4294901760
    %v584 = vsub.f32 %v66, %v583
    %585 = vmatpush1.msra.mxu0 %v584
    %586 = vmatprep.subr.mxu0 0.0
    %v587 = vand.u32 %v67, 4294901760
    %v588 = vsub.f32 %v67, %v587
    %589 = vmatpush1.msra.mxu0 %v588
    %590 = vmatprep.subr.mxu0 0.0
    %v591 = vand.u32 %v68, 4294901760
    %v592 = vsub.f32 %v68, %v591
    %593 = vmatpush1.msra.mxu0 %v592
    %594 = vmatprep.subr.mxu0 0.0
    %v595 = vand.u32 %v69, 4294901760
    %v596 = vsub.f32 %v69, %v595
    %597 = vmatpush1.msra.mxu0 %v596
    %598 = vmatprep.subr.mxu0 0.0
    %v599 = vand.u32 %v70, 4294901760
    %v600 = vsub.f32 %v70, %v599
    %601 = vmatpush1.msra.mxu0 %v600
    %602 = vmatprep.subr.mxu0 0.0
    %v603 = vand.u32 %v71, 4294901760
    %v604 = vsub.f32 %v71, %v603
    %605 = vmatpush1.msra.mxu0 %v604
    %606 = vmatprep.subr.mxu0 0.0
    %v607 = vand.u32 %v72, 4294901760
    %v608 = vsub.f32 %v72, %v607
    %609 = vmatpush1.msra.mxu0 %v608
    %610 = vmatprep.subr.mxu0 0.0
    %v611 = vand.u32 %v73, 4294901760
    %v612 = vsub.f32 %v73, %v611
    %613 = vmatpush1.msra.mxu0 %v612
    %614 = vmatprep.subr.mxu0 0.0
    %v615 = vand.u32 %v74, 4294901760
    %v616 = vsub.f32 %v74, %v615
    %617 = vmatpush1.msra.mxu0 %v616
    %618 = vmatprep.subr.mxu0 0.0
    %v619 = vand.u32 %v75, 4294901760
    %v620 = vsub.f32 %v75, %v619
    %621 = vmatpush1.msra.mxu0 %v620
    %622 = vmatprep.subr.mxu0 0.0
    %v623 = vand.u32 %v76, 4294901760
    %v624 = vsub.f32 %v76, %v623
    %625 = vmatpush1.msra.mxu0 %v624
    %626 = vmatprep.subr.mxu0 0.0
    %627 = vmatpush1.msra.mxu0 0.0
    %628 = vmatprep.subr.mxu0 0.0
    %629 = vmatpush1.msra.mxu0 0.0
    %630 = vmatprep.subr.mxu0 0.0
    %631 = vmatpush1.msra.mxu0 0.0
    %632 = vmatprep.subr.mxu0 0.0
    %633 = vmatpush1.msra.mxu0 0.0
    %634 = vmatprep.subr.mxu0 0.0
    %635 = vmatpush1.msra.mxu0 0.0
    %636 = vmatprep.subr.mxu0 0.0
    %637 = vmatpush1.msra.mxu0 0.0
    %638 = vmatprep.subr.mxu0 0.0
    %639 = vmatpush1.msra.mxu0 0.0
    %640 = vmatprep.subr.mxu0 0.0
    %641 = vmatpush1.msra.mxu0 0.0
    %642 = vmatprep.subr.mxu0 0.0
    %643 = vmatpush1.msra.mxu0 0.0
    %644 = vmatprep.subr.mxu0 0.0
    %645 = vmatpush1.msra.mxu0 0.0
    %646 = vmatprep.subr.mxu0 0.0
    %647 = vmatpush1.msra.mxu0 0.0
    %648 = vmatprep.subr.mxu0 0.0
    %649 = vmatpush1.msra.mxu0 0.0
    %650 = vmatprep.subr.mxu0 0.0
    %651 = vmatpush1.msra.mxu0 0.0
    %652 = vmatprep.subr.mxu0 0.0
    %653 = vmatpush1.msra.mxu0 0.0
    %654 = vmatprep.subr.mxu0 0.0
    %655 = vmatpush1.msra.mxu0 0.0
    %656 = vmatprep.subr.mxu0 0.0
    %657 = vmatpush1.msra.mxu0 0.0
    %658 = vmatprep.mubr.f32.mxu0 0.0
    %v659 = vand.u32 %v45, 4294901760
    %v660 = vsub.f32 %v45, %v659
    %661 = vmatmul.mubr.f32.gmra.mrb[0].mxu0 %v660
    %v662 = vpop.f32.mrb[0].mxu0
    %v663 = vadd.f32 %v469, %v662
    %v664 = vpop.f32.mrb[0].mxu0
    %665 = vmatprep.mubr.f32.mxu0 0.0
    %v666 = vand.u32 %v46, 4294901760
    %v667 = vsub.f32 %v46, %v666
    %668 = vmatmul.mubr.f32.gmra.mrb[0].mxu0 %v667
    %v669 = vpop.f32.mrb[0].mxu0
    %v670 = vadd.f32 %v475, %v669
    %v671 = vpop.f32.mrb[0].mxu0
    %672 = vmatprep.mubr.f32.mxu0 0.0
    %v673 = vand.u32 %v47, 4294901760
    %v674 = vsub.f32 %v47, %v673
    %675 = vmatmul.mubr.f32.gmra.mrb[0].mxu0 %v674
    %v676 = vpop.f32.mrb[0].mxu0
    %v677 = vadd.f32 %v481, %v676
    %v678 = vpop.f32.mrb[0].mxu0
    %679 = vmatprep.mubr.f32.mxu0 0.0
    %v680 = vand.u32 %v48, 4294901760
    %v681 = vsub.f32 %v48, %v680
    %682 = vmatmul.mubr.f32.gmra.mrb[0].mxu0 %v681
    %v683 = vpop.f32.mrb[0].mxu0
    %v684 = vadd.f32 %v487, %v683
    %v685 = vpop.f32.mrb[0].mxu0
    %686 = vmatprep.mubr.f32.mxu0 0.0
    %v687 = vand.u32 %v49, 4294901760
    %v688 = vsub.f32 %v49, %v687
    %689 = vmatmul.mubr.f32.gmra.mrb[0].mxu0 %v688
    %v690 = vpop.f32.mrb[0].mxu0
    %v691 = vadd.f32 %v493, %v690
    %v692 = vpop.f32.mrb[0].mxu0
    %693 = vmatprep.mubr.f32.mxu0 0.0
    %v694 = vand.u32 %v50, 4294901760
    %v695 = vsub.f32 %v50, %v694
    %696 = vmatmul.mubr.f32.gmra.mrb[0].mxu0 %v695
    %v697 = vpop.f32.mrb[0].mxu0
    %v698 = vadd.f32 %v499, %v697
    %v699 = vpop.f32.mrb[0].mxu0
    %700 = vmatprep.mubr.f32.mxu0 0.0
    %v701 = vand.u32 %v51, 4294901760
    %v702 = vsub.f32 %v51, %v701
    %703 = vmatmul.mubr.f32.gmra.mrb[0].mxu0 %v702
    %v704 = vpop.f32.mrb[0].mxu0
    %v705 = vadd.f32 %v505, %v704
    %v706 = vpop.f32.mrb[0].mxu0
    %707 = vmatprep.mubr.f32.mxu0 0.0
    %v708 = vand.u32 %v52, 4294901760
    %v709 = vsub.f32 %v52, %v708
    %710 = vmatmul.mubr.f32.gmra.mrb[0].mxu0 %v709
    %v711 = vpop.f32.mrb[0].mxu0
    %v712 = vadd.f32 %v511, %v711
    %v713 = vpop.f32.mrb[0].mxu0
    %714 = vmatprep.mubr.f32.mxu0 0.0
    %v715 = vand.u32 %v53, 4294901760
    %v716 = vsub.f32 %v53, %v715
    %717 = vmatmul.mubr.f32.gmra.mrb[0].mxu0 %v716
    %v718 = vpop.f32.mrb[0].mxu0
    %v719 = vadd.f32 %v517, %v718
    %v720 = vpop.f32.mrb[0].mxu0
    %721 = vmatprep.mubr.f32.mxu0 0.0
    %v722 = vand.u32 %v54, 4294901760
    %v723 = vsub.f32 %v54, %v722
    %724 = vmatmul.mubr.f32.gmra.mrb[0].mxu0 %v723
    %v725 = vpop.f32.mrb[0].mxu0
    %v726 = vadd.f32 %v523, %v725
    %v727 = vpop.f32.mrb[0].mxu0
    %728 = vmatprep.mubr.f32.mxu0 0.0
    %v729 = vand.u32 %v55, 4294901760
    %v730 = vsub.f32 %v55, %v729
    %731 = vmatmul.mubr.f32.gmra.mrb[0].mxu0 %v730
    %v732 = vpop.f32.mrb[0].mxu0
    %v733 = vadd.f32 %v529, %v732
    %v734 = vpop.f32.mrb[0].mxu0
    %735 = vmatprep.mubr.f32.mxu0 0.0
    %v736 = vand.u32 %v56, 4294901760
    %v737 = vsub.f32 %v56, %v736
    %738 = vmatmul.mubr.f32.gmra.mrb[0].mxu0 %v737
    %v739 = vpop.f32.mrb[0].mxu0
    %v740 = vadd.f32 %v535, %v739
    %v741 = vpop.f32.mrb[0].mxu0
    %742 = vmatprep.mubr.f32.mxu0 0.0
    %v743 = vand.u32 %v57, 4294901760
    %v744 = vsub.f32 %v57, %v743
    %745 = vmatmul.mubr.f32.gmra.mrb[0].mxu0 %v744
    %v746 = vpop.f32.mrb[0].mxu0
    %v747 = vadd.f32 %v541, %v746
    %v748 = vpop.f32.mrb[0].mxu0
    %749 = vmatprep.mubr.f32.mxu0 0.0
    %v750 = vand.u32 %v58, 4294901760
    %v751 = vsub.f32 %v58, %v750
    %752 = vmatmul.mubr.f32.gmra.mrb[0].mxu0 %v751
    %v753 = vpop.f32.mrb[0].mxu0
    %v754 = vadd.f32 %v547, %v753
    %v755 = vpop.f32.mrb[0].mxu0
    %756 = vmatprep.mubr.f32.mxu0 0.0
    %v757 = vand.u32 %v59, 4294901760
    %v758 = vsub.f32 %v59, %v757
    %759 = vmatmul.mubr.f32.gmra.mrb[0].mxu0 %v758
    %v760 = vpop.f32.mrb[0].mxu0
    %v761 = vadd.f32 %v553, %v760
    %v762 = vpop.f32.mrb[0].mxu0
    %763 = vmatprep.mubr.f32.mxu0 0.0
    %v764 = vand.u32 %v60, 4294901760
    %v765 = vsub.f32 %v60, %v764
    %766 = vmatmul.mubr.f32.gmra.mrb[0].mxu0 %v765
    %v767 = vpop.f32.mrb[0].mxu0
    %v768 = vadd.f32 %v559, %v767
    %v769 = vpop.f32.mrb[0].mxu0
    %770 = vdwg.mxu0
    %771 = vmatprep.subr.mxu0 0.0
    %v772 = vand.u32 %v61, 4294901760
    %773 = vmatpush1.msra.mxu0 %v772
    %774 = vmatprep.subr.mxu0 0.0
    %v775 = vand.u32 %v62, 4294901760
    %776 = vmatpush1.msra.mxu0 %v775
    %777 = vmatprep.subr.mxu0 0.0
    %v778 = vand.u32 %v63, 4294901760
    %779 = vmatpush1.msra.mxu0 %v778
    %780 = vmatprep.subr.mxu0 0.0
    %v781 = vand.u32 %v64, 4294901760
    %782 = vmatpush1.msra.mxu0 %v781
    %783 = vmatprep.subr.mxu0 0.0
    %v784 = vand.u32 %v65, 4294901760
    %785 = vmatpush1.msra.mxu0 %v784
    %786 = vmatprep.subr.mxu0 0.0
    %v787 = vand.u32 %v66, 4294901760
    %788 = vmatpush1.msra.mxu0 %v787
    %789 = vmatprep.subr.mxu0 0.0
    %v790 = vand.u32 %v67, 4294901760
    %791 = vmatpush1.msra.mxu0 %v790
    %792 = vmatprep.subr.mxu0 0.0
    %v793 = vand.u32 %v68, 4294901760
    %794 = vmatpush1.msra.mxu0 %v793
    %795 = vmatprep.subr.mxu0 0.0
    %v796 = vand.u32 %v69, 4294901760
    %797 = vmatpush1.msra.mxu0 %v796
    %798 = vmatprep.subr.mxu0 0.0
    %v799 = vand.u32 %v70, 4294901760
    %800 = vmatpush1.msra.mxu0 %v799
    %801 = vmatprep.subr.mxu0 0.0
    %v802 = vand.u32 %v71, 4294901760
    %803 = vmatpush1.msra.mxu0 %v802
    %804 = vmatprep.subr.mxu0 0.0
    %v805 = vand.u32 %v72, 4294901760
    %806 = vmatpush1.msra.mxu0 %v805
    %807 = vmatprep.subr.mxu0 0.0
    %v808 = vand.u32 %v73, 4294901760
    %809 = vmatpush1.msra.mxu0 %v808
    %810 = vmatprep.subr.mxu0 0.0
    %v811 = vand.u32 %v74, 4294901760
    %812 = vmatpush1.msra.mxu0 %v811
    %813 = vmatprep.subr.mxu0 0.0
    %v814 = vand.u32 %v75, 4294901760
    %815 = vmatpush1.msra.mxu0 %v814
    %816 = vmatprep.subr.mxu0 0.0
    %v817 = vand.u32 %v76, 4294901760
    %818 = vmatpush1.msra.mxu0 %v817
    %819 = vmatprep.subr.mxu0 0.0
    %820 = vmatpush1.msra.mxu0 0.0
    %821 = vmatprep.subr.mxu0 0.0
    %822 = vmatpush1.msra.mxu0 0.0
    %823 = vmatprep.subr.mxu0 0.0
    %824 = vmatpush1.msra.mxu0 0.0
    %825 = vmatprep.subr.mxu0 0.0
    %826 = vmatpush1.msra.mxu0 0.0
    %827 = vmatprep.subr.mxu0 0.0
    %828 = vmatpush1.msra.mxu0 0.0
    %829 = vmatprep.subr.mxu0 0.0
    %830 = vmatpush1.msra.mxu0 0.0
    %831 = vmatprep.subr.mxu0 0.0
    %832 = vmatpush1.msra.mxu0 0.0
    %833 = vmatprep.subr.mxu0 0.0
    %834 = vmatpush1.msra.mxu0 0.0
    %835 = vmatprep.subr.mxu0 0.0
    %836 = vmatpush1.msra.mxu0 0.0
    %837 = vmatprep.subr.mxu0 0.0
    %838 = vmatpush1.msra.mxu0 0.0
    %839 = vmatprep.subr.mxu0 0.0
    %840 = vmatpush1.msra.mxu0 0.0
    %841 = vmatprep.subr.mxu0 0.0
    %842 = vmatpush1.msra.mxu0 0.0
    %843 = vmatprep.subr.mxu0 0.0
    %844 = vmatpush1.msra.mxu0 0.0
    %845 = vmatprep.subr.mxu0 0.0
    %846 = vmatpush1.msra.mxu0 0.0
    %847 = vmatprep.subr.mxu0 0.0
    %848 = vmatpush1.msra.mxu0 0.0
    %849 = vmatprep.subr.mxu0 0.0
    %850 = vmatpush1.msra.mxu0 0.0
    %851 = vmatprep.mubr.f32.mxu0 0.0
    %v852 = vand.u32 %v45, 4294901760
    %v853 = vsub.f32 %v45, %v852
    %v854 = vand.u32 %v853, 4294901760
    %855 = vmatmul.mubr.f32.gmra.mrb[0].mxu0 %v854
    %v856 = vpop.f32.mrb[0].mxu0
    %v857 = vadd.f32 %v663, %v856
    %v858 = vpop.f32.mrb[0].mxu0
    %859 = vmatprep.mubr.f32.mxu0 0.0
    %v860 = vand.u32 %v46, 4294901760
    %v861 = vsub.f32 %v46, %v860
    %v862 = vand.u32 %v861, 4294901760
    %863 = vmatmul.mubr.f32.gmra.mrb[0].mxu0 %v862
    %v864 = vpop.f32.mrb[0].mxu0
    %v865 = vadd.f32 %v670, %v864
    %v866 = vpop.f32.mrb[0].mxu0
    %867 = vmatprep.mubr.f32.mxu0 0.0
    %v868 = vand.u32 %v47, 4294901760
    %v869 = vsub.f32 %v47, %v868
    %v870 = vand.u32 %v869, 4294901760
    %871 = vmatmul.mubr.f32.gmra.mrb[0].mxu0 %v870
    %v872 = vpop.f32.mrb[0].mxu0
    %v873 = vadd.f32 %v677, %v872
    %v874 = vpop.f32.mrb[0].mxu0
    %875 = vmatprep.mubr.f32.mxu0 0.0
    %v876 = vand.u32 %v48, 4294901760
    %v877 = vsub.f32 %v48, %v876
    %v878 = vand.u32 %v877, 4294901760
    %879 = vmatmul.mubr.f32.gmra.mrb[0].mxu0 %v878
    %v880 = vpop.f32.mrb[0].mxu0
    %v881 = vadd.f32 %v684, %v880
    %v882 = vpop.f32.mrb[0].mxu0
    %883 = vmatprep.mubr.f32.mxu0 0.0
    %v884 = vand.u32 %v49, 4294901760
    %v885 = vsub.f32 %v49, %v884
    %v886 = vand.u32 %v885, 4294901760
    %887 = vmatmul.mubr.f32.gmra.mrb[0].mxu0 %v886
    %v888 = vpop.f32.mrb[0].mxu0
    %v889 = vadd.f32 %v691, %v888
    %v890 = vpop.f32.mrb[0].mxu0
    %891 = vmatprep.mubr.f32.mxu0 0.0
    %v892 = vand.u32 %v50, 4294901760
    %v893 = vsub.f32 %v50, %v892
    %v894 = vand.u32 %v893, 4294901760
    %895 = vmatmul.mubr.f32.gmra.mrb[0].mxu0 %v894
    %v896 = vpop.f32.mrb[0].mxu0
    %v897 = vadd.f32 %v698, %v896
    %v898 = vpop.f32.mrb[0].mxu0
    %899 = vmatprep.mubr.f32.mxu0 0.0
    %v900 = vand.u32 %v51, 4294901760
    %v901 = vsub.f32 %v51, %v900
    %v902 = vand.u32 %v901, 4294901760
    %903 = vmatmul.mubr.f32.gmra.mrb[0].mxu0 %v902
    %v904 = vpop.f32.mrb[0].mxu0
    %v905 = vadd.f32 %v705, %v904
    %v906 = vpop.f32.mrb[0].mxu0
    %907 = vmatprep.mubr.f32.mxu0 0.0
    %v908 = vand.u32 %v52, 4294901760
    %v909 = vsub.f32 %v52, %v908
    %v910 = vand.u32 %v909, 4294901760
    %911 = vmatmul.mubr.f32.gmra.mrb[0].mxu0 %v910
    %v912 = vpop.f32.mrb[0].mxu0
    %v913 = vadd.f32 %v712, %v912
    %v914 = vpop.f32.mrb[0].mxu0
    %915 = vmatprep.mubr.f32.mxu0 0.0
    %v916 = vand.u32 %v53, 4294901760
    %v917 = vsub.f32 %v53, %v916
    %v918 = vand.u32 %v917, 4294901760
    %919 = vmatmul.mubr.f32.gmra.mrb[0].mxu0 %v918
    %v920 = vpop.f32.mrb[0].mxu0
    %v921 = vadd.f32 %v719, %v920
    %v922 = vpop.f32.mrb[0].mxu0
    %923 = vmatprep.mubr.f32.mxu0 0.0
    %v924 = vand.u32 %v54, 4294901760
    %v925 = vsub.f32 %v54, %v924
    %v926 = vand.u32 %v925, 4294901760
    %927 = vmatmul.mubr.f32.gmra.mrb[0].mxu0 %v926
    %v928 = vpop.f32.mrb[0].mxu0
    %v929 = vadd.f32 %v726, %v928
    %v930 = vpop.f32.mrb[0].mxu0
    %931 = vmatprep.mubr.f32.mxu0 0.0
    %v932 = vand.u32 %v55, 4294901760
    %v933 = vsub.f32 %v55, %v932
    %v934 = vand.u32 %v933, 4294901760
    %935 = vmatmul.mubr.f32.gmra.mrb[0].mxu0 %v934
    %v936 = vpop.f32.mrb[0].mxu0
    %v937 = vadd.f32 %v733, %v936
    %v938 = vpop.f32.mrb[0].mxu0
    %939 = vmatprep.mubr.f32.mxu0 0.0
    %v940 = vand.u32 %v56, 4294901760
    %v941 = vsub.f32 %v56, %v940
    %v942 = vand.u32 %v941, 4294901760
    %943 = vmatmul.mubr.f32.gmra.mrb[0].mxu0 %v942
    %v944 = vpop.f32.mrb[0].mxu0
    %v945 = vadd.f32 %v740, %v944
    %v946 = vpop.f32.mrb[0].mxu0
    %947 = vmatprep.mubr.f32.mxu0 0.0
    %v948 = vand.u32 %v57, 4294901760
    %v949 = vsub.f32 %v57, %v948
    %v950 = vand.u32 %v949, 4294901760
    %951 = vmatmul.mubr.f32.gmra.mrb[0].mxu0 %v950
    %v952 = vpop.f32.mrb[0].mxu0
    %v953 = vadd.f32 %v747, %v952
    %v954 = vpop.f32.mrb[0].mxu0
    %955 = vmatprep.mubr.f32.mxu0 0.0
    %v956 = vand.u32 %v58, 4294901760
    %v957 = vsub.f32 %v58, %v956
    %v958 = vand.u32 %v957, 4294901760
    %959 = vmatmul.mubr.f32.gmra.mrb[0].mxu0 %v958
    %v960 = vpop.f32.mrb[0].mxu0
    %v961 = vadd.f32 %v754, %v960
    %v962 = vpop.f32.mrb[0].mxu0
    %963 = vmatprep.mubr.f32.mxu0 0.0
    %v964 = vand.u32 %v59, 4294901760
    %v965 = vsub.f32 %v59, %v964
    %v966 = vand.u32 %v965, 4294901760
    %967 = vmatmul.mubr.f32.gmra.mrb[0].mxu0 %v966
    %v968 = vpop.f32.mrb[0].mxu0
    %v969 = vadd.f32 %v761, %v968
    %v970 = vpop.f32.mrb[0].mxu0
    %971 = vmatprep.mubr.f32.mxu0 0.0
    %v972 = vand.u32 %v60, 4294901760
    %v973 = vsub.f32 %v60, %v972
    %v974 = vand.u32 %v973, 4294901760
    %975 = vmatmul.mubr.f32.gmra.mrb[0].mxu0 %v974
    %v976 = vpop.f32.mrb[0].mxu0
    %v977 = vadd.f32 %v768, %v976
    %v978 = vpop.f32.mrb[0].mxu0
    %979 = vdwg.mxu0
    %980 = vmatprep.subr.mxu0 0.0
    %v981 = vand.u32 %v61, 4294901760
    %v982 = vsub.f32 %v61, %v981
    %v983 = vand.u32 %v982, 4294901760
    %984 = vmatpush1.msra.mxu0 %v983
    %985 = vmatprep.subr.mxu0 0.0
    %v986 = vand.u32 %v62, 4294901760
    %v987 = vsub.f32 %v62, %v986
    %v988 = vand.u32 %v987, 4294901760
    %989 = vmatpush1.msra.mxu0 %v988
    %990 = vmatprep.subr.mxu0 0.0
    %v991 = vand.u32 %v63, 4294901760
    %v992 = vsub.f32 %v63, %v991
    %v993 = vand.u32 %v992, 4294901760
    %994 = vmatpush1.msra.mxu0 %v993
    %995 = vmatprep.subr.mxu0 0.0
    %v996 = vand.u32 %v64, 4294901760
    %v997 = vsub.f32 %v64, %v996
    %v998 = vand.u32 %v997, 4294901760
    %999 = vmatpush1.msra.mxu0 %v998
    %1000 = vmatprep.subr.mxu0 0.0
    %v1001 = vand.u32 %v65, 4294901760
    %v1002 = vsub.f32 %v65, %v1001
    %v1003 = vand.u32 %v1002, 4294901760
    %1004 = vmatpush1.msra.mxu0 %v1003
    %1005 = vmatprep.subr.mxu0 0.0
    %v1006 = vand.u32 %v66, 4294901760
    %v1007 = vsub.f32 %v66, %v1006
    %v1008 = vand.u32 %v1007, 4294901760
    %1009 = vmatpush1.msra.mxu0 %v1008
    %1010 = vmatprep.subr.mxu0 0.0
    %v1011 = vand.u32 %v67, 4294901760
    %v1012 = vsub.f32 %v67, %v1011
    %v1013 = vand.u32 %v1012, 4294901760
    %1014 = vmatpush1.msra.mxu0 %v1013
    %1015 = vmatprep.subr.mxu0 0.0
    %v1016 = vand.u32 %v68, 4294901760
    %v1017 = vsub.f32 %v68, %v1016
    %v1018 = vand.u32 %v1017, 4294901760
    %1019 = vmatpush1.msra.mxu0 %v1018
    %1020 = vmatprep.subr.mxu0 0.0
    %v1021 = vand.u32 %v69, 4294901760
    %v1022 = vsub.f32 %v69, %v1021
    %v1023 = vand.u32 %v1022, 4294901760
    %1024 = vmatpush1.msra.mxu0 %v1023
    %1025 = vmatprep.subr.mxu0 0.0
    %v1026 = vand.u32 %v70, 4294901760
    %v1027 = vsub.f32 %v70, %v1026
    %v1028 = vand.u32 %v1027, 4294901760
    %1029 = vmatpush1.msra.mxu0 %v1028
    %1030 = vmatprep.subr.mxu0 0.0
    %v1031 = vand.u32 %v71, 4294901760
    %v1032 = vsub.f32 %v71, %v1031
    %v1033 = vand.u32 %v1032, 4294901760
    %1034 = vmatpush1.msra.mxu0 %v1033
    %1035 = vmatprep.subr.mxu0 0.0
    %v1036 = vand.u32 %v72, 4294901760
    %v1037 = vsub.f32 %v72, %v1036
    %v1038 = vand.u32 %v1037, 4294901760
    %1039 = vmatpush1.msra.mxu0 %v1038
    %1040 = vmatprep.subr.mxu0 0.0
    %v1041 = vand.u32 %v73, 4294901760
    %v1042 = vsub.f32 %v73, %v1041
    %v1043 = vand.u32 %v1042, 4294901760
    %1044 = vmatpush1.msra.mxu0 %v1043
    %1045 = vmatprep.subr.mxu0 0.0
    %v1046 = vand.u32 %v74, 4294901760
    %v1047 = vsub.f32 %v74, %v1046
    %v1048 = vand.u32 %v1047, 4294901760
    %1049 = vmatpush1.msra.mxu0 %v1048
    %1050 = vmatprep.subr.mxu0 0.0
    %v1051 = vand.u32 %v75, 4294901760
    %v1052 = vsub.f32 %v75, %v1051
    %v1053 = vand.u32 %v1052, 4294901760
    %1054 = vmatpush1.msra.mxu0 %v1053
    %1055 = vmatprep.subr.mxu0 0.0
    %v1056 = vand.u32 %v76, 4294901760
    %v1057 = vsub.f32 %v76, %v1056
    %v1058 = vand.u32 %v1057, 4294901760
    %1059 = vmatpush1.msra.mxu0 %v1058
    %1060 = vmatprep.subr.mxu0 0.0
    %1061 = vmatpush1.msra.mxu0 0.0
    %1062 = vmatprep.subr.mxu0 0.0
    %1063 = vmatpush1.msra.mxu0 0.0
    %1064 = vmatprep.subr.mxu0 0.0
    %1065 = vmatpush1.msra.mxu0 0.0
    %1066 = vmatprep.subr.mxu0 0.0
    %1067 = vmatpush1.msra.mxu0 0.0
    %1068 = vmatprep.subr.mxu0 0.0
    %1069 = vmatpush1.msra.mxu0 0.0
    %1070 = vmatprep.subr.mxu0 0.0
    %1071 = vmatpush1.msra.mxu0 0.0
    %1072 = vmatprep.subr.mxu0 0.0
    %1073 = vmatpush1.msra.mxu0 0.0
    %1074 = vmatprep.subr.mxu0 0.0
    %1075 = vmatpush1.msra.mxu0 0.0
    %1076 = vmatprep.subr.mxu0 0.0
    %1077 = vmatpush1.msra.mxu0 0.0
    %1078 = vmatprep.subr.mxu0 0.0
    %1079 = vmatpush1.msra.mxu0 0.0
    %1080 = vmatprep.subr.mxu0 0.0
    %1081 = vmatpush1.msra.mxu0 0.0
    %1082 = vmatprep.subr.mxu0 0.0
    %1083 = vmatpush1.msra.mxu0 0.0
    %1084 = vmatprep.subr.mxu0 0.0
    %1085 = vmatpush1.msra.mxu0 0.0
    %1086 = vmatprep.subr.mxu0 0.0
    %1087 = vmatpush1.msra.mxu0 0.0
    %1088 = vmatprep.subr.mxu0 0.0
    %1089 = vmatpush1.msra.mxu0 0.0
    %1090 = vmatprep.subr.mxu0 0.0
    %1091 = vmatpush1.msra.mxu0 0.0
    %1092 = vmatprep.mubr.f32.mxu0 0.0
    %v1093 = vand.u32 %v45, 4294901760
    %1094 = vmatmul.mubr.f32.gmra.mrb[0].mxu0 %v1093
    %v1095 = vpop.f32.mrb[0].mxu0
    %v1096 = vadd.f32 %v857, %v1095
    %v1097 = vpop.f32.mrb[0].mxu0
    %1098 = vmatprep.mubr.f32.mxu0 0.0
    %v1099 = vand.u32 %v46, 4294901760
    %1100 = vmatmul.mubr.f32.gmra.mrb[0].mxu0 %v1099
    %v1101 = vpop.f32.mrb[0].mxu0
    %v1102 = vadd.f32 %v865, %v1101
    %v1103 = vpop.f32.mrb[0].mxu0
    %1104 = vmatprep.mubr.f32.mxu0 0.0
    %v1105 = vand.u32 %v47, 4294901760
    %1106 = vmatmul.mubr.f32.gmra.mrb[0].mxu0 %v1105
    %v1107 = vpop.f32.mrb[0].mxu0
    %v1108 = vadd.f32 %v873, %v1107
    %v1109 = vpop.f32.mrb[0].mxu0
    %1110 = vmatprep.mubr.f32.mxu0 0.0
    %v1111 = vand.u32 %v48, 4294901760
    %1112 = vmatmul.mubr.f32.gmra.mrb[0].mxu0 %v1111
    %v1113 = vpop.f32.mrb[0].mxu0
    %v1114 = vadd.f32 %v881, %v1113
    %v1115 = vpop.f32.mrb[0].mxu0
    %1116 = vmatprep.mubr.f32.mxu0 0.0
    %v1117 = vand.u32 %v49, 4294901760
    %1118 = vmatmul.mubr.f32.gmra.mrb[0].mxu0 %v1117
    %v1119 = vpop.f32.mrb[0].mxu0
    %v1120 = vadd.f32 %v889, %v1119
    %v1121 = vpop.f32.mrb[0].mxu0
    %1122 = vmatprep.mubr.f32.mxu0 0.0
    %v1123 = vand.u32 %v50, 4294901760
    %1124 = vmatmul.mubr.f32.gmra.mrb[0].mxu0 %v1123
    %v1125 = vpop.f32.mrb[0].mxu0
    %v1126 = vadd.f32 %v897, %v1125
    %v1127 = vpop.f32.mrb[0].mxu0
    %1128 = vmatprep.mubr.f32.mxu0 0.0
    %v1129 = vand.u32 %v51, 4294901760
    %1130 = vmatmul.mubr.f32.gmra.mrb[0].mxu0 %v1129
    %v1131 = vpop.f32.mrb[0].mxu0
    %v1132 = vadd.f32 %v905, %v1131
    %v1133 = vpop.f32.mrb[0].mxu0
    %1134 = vmatprep.mubr.f32.mxu0 0.0
    %v1135 = vand.u32 %v52, 4294901760
    %1136 = vmatmul.mubr.f32.gmra.mrb[0].mxu0 %v1135
    %v1137 = vpop.f32.mrb[0].mxu0
    %v1138 = vadd.f32 %v913, %v1137
    %v1139 = vpop.f32.mrb[0].mxu0
    %1140 = vmatprep.mubr.f32.mxu0 0.0
    %v1141 = vand.u32 %v53, 4294901760
    %1142 = vmatmul.mubr.f32.gmra.mrb[0].mxu0 %v1141
    %v1143 = vpop.f32.mrb[0].mxu0
    %v1144 = vadd.f32 %v921, %v1143
    %v1145 = vpop.f32.mrb[0].mxu0
    %1146 = vmatprep.mubr.f32.mxu0 0.0
    %v1147 = vand.u32 %v54, 4294901760
    %1148 = vmatmul.mubr.f32.gmra.mrb[0].mxu0 %v1147
    %v1149 = vpop.f32.mrb[0].mxu0
    %v1150 = vadd.f32 %v929, %v1149
    %v1151 = vpop.f32.mrb[0].mxu0
    %1152 = vmatprep.mubr.f32.mxu0 0.0
    %v1153 = vand.u32 %v55, 4294901760
    %1154 = vmatmul.mubr.f32.gmra.mrb[0].mxu0 %v1153
    %v1155 = vpop.f32.mrb[0].mxu0
    %v1156 = vadd.f32 %v937, %v1155
    %v1157 = vpop.f32.mrb[0].mxu0
    %1158 = vmatprep.mubr.f32.mxu0 0.0
    %v1159 = vand.u32 %v56, 4294901760
    %1160 = vmatmul.mubr.f32.gmra.mrb[0].mxu0 %v1159
    %v1161 = vpop.f32.mrb[0].mxu0
    %v1162 = vadd.f32 %v945, %v1161
    %v1163 = vpop.f32.mrb[0].mxu0
    %1164 = vmatprep.mubr.f32.mxu0 0.0
    %v1165 = vand.u32 %v57, 4294901760
    %1166 = vmatmul.mubr.f32.gmra.mrb[0].mxu0 %v1165
    %v1167 = vpop.f32.mrb[0].mxu0
    %v1168 = vadd.f32 %v953, %v1167
    %v1169 = vpop.f32.mrb[0].mxu0
    %1170 = vmatprep.mubr.f32.mxu0 0.0
    %v1171 = vand.u32 %v58, 4294901760
    %1172 = vmatmul.mubr.f32.gmra.mrb[0].mxu0 %v1171
    %v1173 = vpop.f32.mrb[0].mxu0
    %v1174 = vadd.f32 %v961, %v1173
    %v1175 = vpop.f32.mrb[0].mxu0
    %1176 = vmatprep.mubr.f32.mxu0 0.0
    %v1177 = vand.u32 %v59, 4294901760
    %1178 = vmatmul.mubr.f32.gmra.mrb[0].mxu0 %v1177
    %v1179 = vpop.f32.mrb[0].mxu0
    %v1180 = vadd.f32 %v969, %v1179
    %v1181 = vpop.f32.mrb[0].mxu0
    %1182 = vmatprep.mubr.f32.mxu0 0.0
    %v1183 = vand.u32 %v60, 4294901760
    %1184 = vmatmul.mubr.f32.gmra.mrb[0].mxu0 %v1183
    %v1185 = vpop.f32.mrb[0].mxu0
    %v1186 = vadd.f32 %v977, %v1185
    %v1187 = vpop.f32.mrb[0].mxu0
    %1188 = vdwg.mxu0
    %1189 = vmatprep.subr.mxu0 0.0
    %v1190 = vand.u32 %v61, 4294901760
    %1191 = vmatpush1.msra.mxu0 %v1190
    %1192 = vmatprep.subr.mxu0 0.0
    %v1193 = vand.u32 %v62, 4294901760
    %1194 = vmatpush1.msra.mxu0 %v1193
    %1195 = vmatprep.subr.mxu0 0.0
    %v1196 = vand.u32 %v63, 4294901760
    %1197 = vmatpush1.msra.mxu0 %v1196
    %1198 = vmatprep.subr.mxu0 0.0
    %v1199 = vand.u32 %v64, 4294901760
    %1200 = vmatpush1.msra.mxu0 %v1199
    %1201 = vmatprep.subr.mxu0 0.0
    %v1202 = vand.u32 %v65, 4294901760
    %1203 = vmatpush1.msra.mxu0 %v1202
    %1204 = vmatprep.subr.mxu0 0.0
    %v1205 = vand.u32 %v66, 4294901760
    %1206 = vmatpush1.msra.mxu0 %v1205
    %1207 = vmatprep.subr.mxu0 0.0
    %v1208 = vand.u32 %v67, 4294901760
    %1209 = vmatpush1.msra.mxu0 %v1208
    %1210 = vmatprep.subr.mxu0 0.0
    %v1211 = vand.u32 %v68, 4294901760
    %1212 = vmatpush1.msra.mxu0 %v1211
    %1213 = vmatprep.subr.mxu0 0.0
    %v1214 = vand.u32 %v69, 4294901760
    %1215 = vmatpush1.msra.mxu0 %v1214
    %1216 = vmatprep.subr.mxu0 0.0
    %v1217 = vand.u32 %v70, 4294901760
    %1218 = vmatpush1.msra.mxu0 %v1217
    %1219 = vmatprep.subr.mxu0 0.0
    %v1220 = vand.u32 %v71, 4294901760
    %1221 = vmatpush1.msra.mxu0 %v1220
    %1222 = vmatprep.subr.mxu0 0.0
    %v1223 = vand.u32 %v72, 4294901760
    %1224 = vmatpush1.msra.mxu0 %v1223
    %1225 = vmatprep.subr.mxu0 0.0
    %v1226 = vand.u32 %v73, 4294901760
    %1227 = vmatpush1.msra.mxu0 %v1226
    %1228 = vmatprep.subr.mxu0 0.0
    %v1229 = vand.u32 %v74, 4294901760
    %1230 = vmatpush1.msra.mxu0 %v1229
    %1231 = vmatprep.subr.mxu0 0.0
    %v1232 = vand.u32 %v75, 4294901760
    %1233 = vmatpush1.msra.mxu0 %v1232
    %1234 = vmatprep.subr.mxu0 0.0
    %v1235 = vand.u32 %v76, 4294901760
    %1236 = vmatpush1.msra.mxu0 %v1235
    %1237 = vmatprep.subr.mxu0 0.0
    %1238 = vmatpush1.msra.mxu0 0.0
    %1239 = vmatprep.subr.mxu0 0.0
    %1240 = vmatpush1.msra.mxu0 0.0
    %1241 = vmatprep.subr.mxu0 0.0
    %1242 = vmatpush1.msra.mxu0 0.0
    %1243 = vmatprep.subr.mxu0 0.0
    %1244 = vmatpush1.msra.mxu0 0.0
    %1245 = vmatprep.subr.mxu0 0.0
    %1246 = vmatpush1.msra.mxu0 0.0
    %1247 = vmatprep.subr.mxu0 0.0
    %1248 = vmatpush1.msra.mxu0 0.0
    %1249 = vmatprep.subr.mxu0 0.0
    %1250 = vmatpush1.msra.mxu0 0.0
    %1251 = vmatprep.subr.mxu0 0.0
    %1252 = vmatpush1.msra.mxu0 0.0
    %1253 = vmatprep.subr.mxu0 0.0
    %1254 = vmatpush1.msra.mxu0 0.0
    %1255 = vmatprep.subr.mxu0 0.0
    %1256 = vmatpush1.msra.mxu0 0.0
    %1257 = vmatprep.subr.mxu0 0.0
    %1258 = vmatpush1.msra.mxu0 0.0
    %1259 = vmatprep.subr.mxu0 0.0
    %1260 = vmatpush1.msra.mxu0 0.0
    %1261 = vmatprep.subr.mxu0 0.0
    %1262 = vmatpush1.msra.mxu0 0.0
    %1263 = vmatprep.subr.mxu0 0.0
    %1264 = vmatpush1.msra.mxu0 0.0
    %1265 = vmatprep.subr.mxu0 0.0
    %1266 = vmatpush1.msra.mxu0 0.0
    %1267 = vmatprep.subr.mxu0 0.0
    %1268 = vmatpush1.msra.mxu0 0.0
    %1269 = vmatprep.mubr.f32.mxu0 0.0
    %v1270 = vand.u32 %v45, 4294901760
    %1271 = vmatmul.mubr.f32.gmra.mrb[0].mxu0 %v1270
    %v1272 = vpop.f32.mrb[0].mxu0
    %v1273 = vadd.f32 %v1096, %v1272
    %v1274 = vpop.f32.mrb[0].mxu0
    %1275 = vmatprep.mubr.f32.mxu0 0.0
    %v1276 = vand.u32 %v46, 4294901760
    %1277 = vmatmul.mubr.f32.gmra.mrb[0].mxu0 %v1276
    %v1278 = vpop.f32.mrb[0].mxu0
    %v1279 = vadd.f32 %v1102, %v1278
    %v1280 = vpop.f32.mrb[0].mxu0
    %1281 = vmatprep.mubr.f32.mxu0 0.0
    %v1282 = vand.u32 %v47, 4294901760
    %1283 = vmatmul.mubr.f32.gmra.mrb[0].mxu0 %v1282
    %v1284 = vpop.f32.mrb[0].mxu0
    %v1285 = vadd.f32 %v1108, %v1284
    %v1286 = vpop.f32.mrb[0].mxu0
    %1287 = vmatprep.mubr.f32.mxu0 0.0
    %v1288 = vand.u32 %v48, 4294901760
    %1289 = vmatmul.mubr.f32.gmra.mrb[0].mxu0 %v1288
    %v1290 = vpop.f32.mrb[0].mxu0
    %v1291 = vadd.f32 %v1114, %v1290
    %v1292 = vpop.f32.mrb[0].mxu0
    %1293 = vmatprep.mubr.f32.mxu0 0.0
    %v1294 = vand.u32 %v49, 4294901760
    %1295 = vmatmul.mubr.f32.gmra.mrb[0].mxu0 %v1294
    %v1296 = vpop.f32.mrb[0].mxu0
    %v1297 = vadd.f32 %v1120, %v1296
    %v1298 = vpop.f32.mrb[0].mxu0
    %1299 = vmatprep.mubr.f32.mxu0 0.0
    %v1300 = vand.u32 %v50, 4294901760
    %1301 = vmatmul.mubr.f32.gmra.mrb[0].mxu0 %v1300
    %v1302 = vpop.f32.mrb[0].mxu0
    %v1303 = vadd.f32 %v1126, %v1302
    %v1304 = vpop.f32.mrb[0].mxu0
    %1305 = vmatprep.mubr.f32.mxu0 0.0
    %v1306 = vand.u32 %v51, 4294901760
    %1307 = vmatmul.mubr.f32.gmra.mrb[0].mxu0 %v1306
    %v1308 = vpop.f32.mrb[0].mxu0
    %v1309 = vadd.f32 %v1132, %v1308
    %v1310 = vpop.f32.mrb[0].mxu0
    %1311 = vmatprep.mubr.f32.mxu0 0.0
    %v1312 = vand.u32 %v52, 4294901760
    %1313 = vmatmul.mubr.f32.gmra.mrb[0].mxu0 %v1312
    %v1314 = vpop.f32.mrb[0].mxu0
    %v1315 = vadd.f32 %v1138, %v1314
    %v1316 = vpop.f32.mrb[0].mxu0
    %1317 = vmatprep.mubr.f32.mxu0 0.0
    %v1318 = vand.u32 %v53, 4294901760
    %1319 = vmatmul.mubr.f32.gmra.mrb[0].mxu0 %v1318
    %v1320 = vpop.f32.mrb[0].mxu0
    %v1321 = vadd.f32 %v1144, %v1320
    %v1322 = vpop.f32.mrb[0].mxu0
    %1323 = vmatprep.mubr.f32.mxu0 0.0
    %v1324 = vand.u32 %v54, 4294901760
    %1325 = vmatmul.mubr.f32.gmra.mrb[0].mxu0 %v1324
    %v1326 = vpop.f32.mrb[0].mxu0
    %v1327 = vadd.f32 %v1150, %v1326
    %v1328 = vpop.f32.mrb[0].mxu0
    %1329 = vmatprep.mubr.f32.mxu0 0.0
    %v1330 = vand.u32 %v55, 4294901760
    %1331 = vmatmul.mubr.f32.gmra.mrb[0].mxu0 %v1330
    %v1332 = vpop.f32.mrb[0].mxu0
    %v1333 = vadd.f32 %v1156, %v1332
    %v1334 = vpop.f32.mrb[0].mxu0
    %1335 = vmatprep.mubr.f32.mxu0 0.0
    %v1336 = vand.u32 %v56, 4294901760
    %1337 = vmatmul.mubr.f32.gmra.mrb[0].mxu0 %v1336
    %v1338 = vpop.f32.mrb[0].mxu0
    %v1339 = vadd.f32 %v1162, %v1338
    %v1340 = vpop.f32.mrb[0].mxu0
    %1341 = vmatprep.mubr.f32.mxu0 0.0
    %v1342 = vand.u32 %v57, 4294901760
    %1343 = vmatmul.mubr.f32.gmra.mrb[0].mxu0 %v1342
    %v1344 = vpop.f32.mrb[0].mxu0
    %v1345 = vadd.f32 %v1168, %v1344
    %v1346 = vpop.f32.mrb[0].mxu0
    %1347 = vmatprep.mubr.f32.mxu0 0.0
    %v1348 = vand.u32 %v58, 4294901760
    %1349 = vmatmul.mubr.f32.gmra.mrb[0].mxu0 %v1348
    %v1350 = vpop.f32.mrb[0].mxu0
    %v1351 = vadd.f32 %v1174, %v1350
    %v1352 = vpop.f32.mrb[0].mxu0
    %1353 = vmatprep.mubr.f32.mxu0 0.0
    %v1354 = vand.u32 %v59, 4294901760
    %1355 = vmatmul.mubr.f32.gmra.mrb[0].mxu0 %v1354
    %v1356 = vpop.f32.mrb[0].mxu0
    %v1357 = vadd.f32 %v1180, %v1356
    %v1358 = vpop.f32.mrb[0].mxu0
    %1359 = vmatprep.mubr.f32.mxu0 0.0
    %v1360 = vand.u32 %v60, 4294901760
    %1361 = vmatmul.mubr.f32.gmra.mrb[0].mxu0 %v1360
    %v1362 = vpop.f32.mrb[0].mxu0
    %v1363 = vadd.f32 %v1186, %v1362
    %v1364 = vpop.f32.mrb[0].mxu0
    %1365 = vdwg.mxu0
    %vm1366 = vcmask 31744
    %1367 = vst.msk [vmem:[#allocation8] sm:$0xff] %vm1366, %v1273
    %1368 = vst.msk [vmem:[#allocation8 + $0x8] sm:$0xff] %vm1366, %v1279
    %1369 = vst.msk [vmem:[#allocation8 + $0x10] sm:$0xff] %vm1366, %v1285
    %1370 = vst.msk [vmem:[#allocation8 + $0x18] sm:$0xff] %vm1366, %v1291
    %1371 = vst.msk [vmem:[#allocation8 + $0x20] sm:$0xff] %vm1366, %v1297
    %1372 = vst.msk [vmem:[#allocation8 + $0x28] sm:$0xff] %vm1366, %v1303
    %1373 = vst.msk [vmem:[#allocation8 + $0x30] sm:$0xff] %vm1366, %v1309
    %1374 = vst.msk [vmem:[#allocation8 + $0x38] sm:$0xff] %vm1366, %v1315
    %1375 = vst.msk [vmem:[#allocation8 + $0x40] sm:$0xff] %vm1366, %v1321
    %1376 = vst.msk [vmem:[#allocation8 + $0x48] sm:$0xff] %vm1366, %v1327
    %1377 = vst.msk [vmem:[#allocation8 + $0x50] sm:$0xff] %vm1366, %v1333
    %1378 = vst.msk [vmem:[#allocation8 + $0x58] sm:$0xff] %vm1366, %v1339
    %1379 = vst.msk [vmem:[#allocation8 + $0x60] sm:$0xff] %vm1366, %v1345
    %1380 = vst.msk [vmem:[#allocation8 + $0x68] sm:$0xff] %vm1366, %v1351
    %1381 = vst.msk [vmem:[#allocation8 + $0x70] sm:$0xff] %vm1366, %v1357
    %1382 = vst.msk [vmem:[#allocation8 + $0x78] sm:$0xff] %vm1366, %v1363
    // Predicated region
    $region22: #{tpu_custom_call.1} parent=1 // pred_check
      _
    $region23: #{tpu_custom_call.1} parent=1 // pred_check_branch
      %1384 = sbr.rel (0) target = $region25
    $region24: #{tpu_custom_call.1} parent=1 // pred_region
      %s1386 = ssub.s32 2048, 2048
      %1387 = vsyncadd [#allocation5], %s1386
      %s1388 = sshll.u32 [#allocation8], 4
      %s1389 = int_to_ptr.vmem [resolvable:$true] %s1388
      %1394 = dma.vmem_to_hbm [thread:$0]  %s1389, 2048, %s3, [#allocation5], 128, 128, 8
    $region25: #{tpu_custom_call.1} parent=1 // pred_fallthru
      _
    // Predicated region
    $region26: #{tpu_custom_call.1} parent=1 // pred_check
      _
    $region27: #{tpu_custom_call.1} parent=1 // pred_check_branch
      %1396 = sbr.rel (0) target = $region29
    $region28: #{tpu_custom_call.1} parent=1 // pred_region
      %1397 = dma.done [#allocation5], 2048
    $region29: #{tpu_custom_call.1} parent=1 // pred_fallthru
      _
    %1398 = vsyncpa [#allocation4], 1
    %1399 = vsyncpa [#allocation7], 1
    %1400 = vsyncpa [#allocation5], 1

</llo_original>
